<compile_context>
chip_gen: v7x
topology: tpu7x:2x2x1
jax: 0.10.0
libtpu: 0.0.40
codegen_flags: <defaults>
</compile_context>

<pallas_src>
import math

import jax
import jax.numpy as jnp
from jax import lax
from jax.experimental import pallas as pl
from jax.experimental.pallas import tpu as pltpu

_LANES = 128
_SUBLANES = 8


def _make_kernel(packed: bool):
    if packed:
        def kernel(x_ref, r_ref, phase_ref, sel_ref, out_ref):
            # x_ref:   [TB, Gp] f32   packed batch values (Gp >= G rows per VMEM row)
            # sel_ref: [Gp, L]  f32   one-hot segment-selection matrix
            # r_ref:   [1, L]   f32   -log(1e4)/(k+1) pattern, tiled G times
            # phase_ref:[1, L]  f32   pi/2 on even lanes of each segment, 0 on odd
            # out_ref: [TB, L]
            # Lane-broadcast each packed x value across its d_model-lane segment on the
            # (otherwise idle) MXU. Exact: sel is 0/1, HIGHEST keeps f32 mantissa.
            xb = jnp.dot(x_ref[...], sel_ref[...],
                         preferred_element_type=jnp.float32,
                         precision=lax.Precision.HIGHEST)
            angle = xb * jnp.exp(xb * r_ref[...])                 # 1 EUP exp / element
            out_ref[...] = jnp.cos(angle - phase_ref[...]).astype(out_ref.dtype)
    else:
        def kernel(x_ref, r_ref, phase_ref, out_ref):
            # Single hoisted lane broadcast of x, reused by both multiplies.
            xb = jnp.broadcast_to(x_ref[...], out_ref.shape)
            angle = xb * jnp.exp(xb * r_ref[...])
            out_ref[...] = jnp.cos(angle - phase_ref[...]).astype(out_ref.dtype)
    return kernel


def _choose_tile_rows(n_rows: int, lane_width: int) -> int:
    """Largest row tile (multiple of 8) whose double-buffered VMEM working set stays
    ~<= 12 MiB.  Accounts for the 128-lane padding of BOTH the output tile and the
    narrow x block (a (tb, Gp) f32 block occupies tb*512 B in VMEM, not tb*Gp*4)."""
    out_row_bytes = max(lane_width, _LANES) * 4      # output tile, lane-padded
    x_row_bytes = _LANES * 4                         # x block lane-pads to 128 lanes
    per_row = out_row_bytes + x_row_bytes
    budget = 12 * 1024 * 1024                        # total double-buffered in+out target
    tb = max(_SUBLANES, (budget // (2 * per_row)) // _SUBLANES * _SUBLANES)
    rows_pad8 = ((n_rows + _SUBLANES - 1) // _SUBLANES) * _SUBLANES
    # Keep >= 2 grid steps when there is enough work (pipeline overlap; v7x's two TCs
    # only share a "parallel" axis when it has >= 2 tiles).
    if rows_pad8 >= 2 * _SUBLANES:
        half = ((rows_pad8 // 2 + _SUBLANES - 1) // _SUBLANES) * _SUBLANES
        tb = min(tb, max(_SUBLANES, half))
    tb = min(tb, rows_pad8)
    return max(_SUBLANES, tb // _SUBLANES * _SUBLANES)


def positional_encoding(x, d_model: int, out_dtype=jnp.float32):
    """x: numeric array of any shape -> pe: [*x.shape, d_model] (float32 by default).
    Set out_dtype=jnp.bfloat16 to halve HBM write traffic if the consumer tolerates it."""
    assert d_model % 2 == 0, "d_model must be even"
    orig_shape = x.shape
    B = math.prod(orig_shape) if orig_shape else 1
    xf = x.reshape(B).astype(jnp.float32)

    # Lane packing: G batch rows per 128-lane VMEM row when d_model < 128.
    G = (_LANES // d_model) if d_model < _LANES else 1
    G = max(G, 1)
    L = G * d_model
    packed = G > 1

    R = -(-B // G)                       # packed rows needed to cover B
    Bp = R * G
    if Bp != B:
        # TODO(synk): B % G != 0 forces the post-call slice below (one extra HBM copy).
        xf = jnp.pad(xf, (0, Bp - B))

    # Lane-constant tables, hoisted out of the kernel; resident in VMEM across the grid.
    j = jnp.arange(d_model, dtype=jnp.int32)
    r1 = -math.log(10000.0) / (j // 2 + 1).astype(jnp.float32)
    phase1 = jnp.where(j % 2 == 0, jnp.float32(math.pi / 2.0), jnp.float32(0.0))
    r = jnp.tile(r1, (G,)).reshape(1, L)
    phase = jnp.tile(phase1, (G,)).reshape(1, L)

    if packed:
        Gp = max(G, _SUBLANES)           # pad matmul K to a full sublane tile
        x2 = xf.reshape(R, G)
        if Gp != G:
            x2 = jnp.pad(x2, ((0, 0), (0, Gp - G)))
        sel = (jnp.arange(L, dtype=jnp.int32)[None, :] // d_model
               == jnp.arange(Gp, dtype=jnp.int32)[:, None]).astype(jnp.float32)
    else:
        Gp = 1
        x2 = xf.reshape(R, 1)
        sel = None

    tb = _choose_tile_rows(R, L)
    n_tiles = pl.cdiv(R, tb)             # ragged last block handled by Pallas masking

    in_specs = [
        pl.BlockSpec((tb, Gp), lambda i: (i, 0)),       # x tile
        pl.BlockSpec((1, L), lambda i: (0, 0)),         # r (resident, no re-DMA)
        pl.BlockSpec((1, L), lambda i: (0, 0)),         # phase (resident, no re-DMA)
    ]
    args = [x2, r, phase]
    if packed:
        in_specs.append(pl.BlockSpec((Gp, L), lambda i: (0, 0)))   # selection matrix
        args.append(sel)

    out = pl.pallas_call(
        _make_kernel(packed),
        out_shape=jax.ShapeDtypeStruct((R, L), out_dtype),
        grid=(n_tiles,),
        in_specs=in_specs,
        out_specs=pl.BlockSpec((tb, L), lambda i: (i, 0)),
        compiler_params=pltpu.CompilerParams(
            dimension_semantics=("parallel",),
            vmem_limit_bytes=32 * 1024 * 1024),
    )(*args)

    pe = out.reshape(Bp, d_model)        # free row-major view of the packed output
    if Bp != B:
        pe = pe[:B]                      # only when B % G != 0
    return pe.reshape(*orig_shape, d_model)


def _reference(x, d_model):
    # Pure-JAX reference mirroring the PyTorch forward (eval mode).
    half = d_model // 2
    r = -math.log(10000.0) / jnp.arange(1, half + 1, dtype=jnp.float32)
    xf = x.astype(jnp.float32)[..., None]
    angle = xf * jnp.exp(xf * r)
    pe = jnp.zeros((*x.shape, d_model), jnp.float32)
    pe = pe.at[..., 0::2].set(jnp.sin(angle))
    pe = pe.at[..., 1::2].set(jnp.cos(angle))
    return pe


if __name__ == "__main__":
    d_model = 32

    # (a) small batch, lane-packed path (G = 4), single (partial) tile.
    x = jax.random.uniform(jax.random.PRNGKey(0), (8,), dtype=jnp.float32,
                           minval=0.0, maxval=10.0)
    pe = jax.block_until_ready(positional_encoding(x, d_model))
    assert pe.shape == (8, d_model)
    assert jnp.allclose(pe, _reference(x, d_model), atol=1e-5, rtol=1e-5), "mismatch (a)"

    # (b) ragged batch (B % G != 0): padded + sliced path.
    x2 = jax.random.uniform(jax.random.PRNGKey(1), (10,), dtype=jnp.float32,
                            minval=0.0, maxval=10.0)
    pe2 = jax.block_until_ready(positional_encoding(x2, d_model))
    assert pe2.shape == (10, d_model)
    assert jnp.allclose(pe2, _reference(x2, d_model), atol=1e-5, rtol=1e-5), "mismatch (b)"

    # (c) larger batch: multiple grid tiles ("parallel" axis spans both v7x TCs).
    x3 = jax.random.uniform(jax.random.PRNGKey(2), (4096,), dtype=jnp.float32,
                            minval=0.0, maxval=10.0)
    pe3 = jax.block_until_ready(positional_encoding(x3, d_model))
    assert pe3.shape == (4096, d_model)
    assert jnp.allclose(pe3, _reference(x3, d_model), atol=1e-5, rtol=1e-5), "mismatch (c)"

    # (d) d_model >= 128: already lane-dense, unpacked path.
    x4 = jax.random.uniform(jax.random.PRNGKey(3), (16,), dtype=jnp.float32,
                            minval=0.0, maxval=10.0)
    pe4 = jax.block_until_ready(positional_encoding(x4, 256))
    assert pe4.shape == (16, 256)
    assert jnp.allclose(pe4, _reference(x4, 256), atol=1e-5, rtol=1e-5), "mismatch (d)"

    print("KERNEL_OK")
</pallas_src>

<mosaic_0001>
module attributes {stable_mosaic.version = 11 : i64} {
  func.func @kernel(%arg0: i32, %arg1: memref<8x8xf32, #tpu.memory_space<vmem>>, %arg2: memref<1x128xf32, #tpu.memory_space<vmem>>, %arg3: memref<1x128xf32, #tpu.memory_space<vmem>>, %arg4: memref<8x128xf32, #tpu.memory_space<vmem>>, %arg5: memref<8x128xf32, #tpu.memory_space<vmem>>) attributes {dimension_semantics = [#tpu.dimension_semantics<parallel>], iteration_bounds = array<i64: 1>, scalar_prefetch = 0 : i64, scratch_operands = 0 : i64, tpu.core_type = #tpu.core_type<tc>, window_params = [{transform_indices = @transform_0, window_bounds = array<i64: 8, 8>}, {pipeline_mode = #tpu.pipeline_mode<synchronous>, transform_indices = @transform_1, window_bounds = array<i64: 1, 128>}, {pipeline_mode = #tpu.pipeline_mode<synchronous>, transform_indices = @transform_2, window_bounds = array<i64: 1, 128>}, {pipeline_mode = #tpu.pipeline_mode<synchronous>, transform_indices = @transform_3, window_bounds = array<i64: 8, 128>}, {transform_indices = @transform_4, window_bounds = array<i64: 8, 128>}]} {
    %c0 = arith.constant 0 : index
    %c0_0 = arith.constant 0 : index
    %0 = vector.load %arg1[%c0, %c0_0] : memref<8x8xf32, #tpu.memory_space<vmem>>, vector<8x8xf32>
    %c0_1 = arith.constant 0 : index
    %c0_2 = arith.constant 0 : index
    %1 = vector.load %arg4[%c0_1, %c0_2] : memref<8x128xf32, #tpu.memory_space<vmem>>, vector<8x128xf32>
    %cst = arith.constant dense<0.000000e+00> : vector<8x128xf32>
    %2 = tpu.matmul %0, %1, %cst {dimension_numbers = #tpu.dot_dimension_numbers<[1], [0], [0], [1], [0, 0, 1, 1], [], []>, precision = #tpu.contract_precision<fp32>} : vector<8x8xf32>, vector<8x128xf32>, vector<8x128xf32> -> vector<8x128xf32>
    %c0_3 = arith.constant 0 : index
    %c0_4 = arith.constant 0 : index
    %3 = vector.load %arg2[%c0_3, %c0_4] : memref<1x128xf32, #tpu.memory_space<vmem>>, vector<1x128xf32>
    %4 = vector.broadcast %3 : vector<1x128xf32> to vector<8x128xf32>
    %5 = arith.mulf %2, %4 : vector<8x128xf32>
    %6 = math.exp %5 : vector<8x128xf32>
    %7 = arith.mulf %2, %6 : vector<8x128xf32>
    %c0_5 = arith.constant 0 : index
    %c0_6 = arith.constant 0 : index
    %8 = vector.load %arg3[%c0_5, %c0_6] : memref<1x128xf32, #tpu.memory_space<vmem>>, vector<1x128xf32>
    %9 = vector.broadcast %8 : vector<1x128xf32> to vector<8x128xf32>
    %10 = arith.subf %7, %9 : vector<8x128xf32>
    %11 = math.cos %10 : vector<8x128xf32>
    %c0_7 = arith.constant 0 : index
    %c0_8 = arith.constant 0 : index
    %12 = vector.load %arg5[%c0_7, %c0_8] : memref<8x128xf32, #tpu.memory_space<vmem>>, vector<8x128xf32>
    tpu.vector_store %arg5[%c0_7, %c0_8], %11 {strides = array<i32>} : memref<8x128xf32, #tpu.memory_space<vmem>>, vector<8x128xf32>,
    return
  }
  func.func @transform_0(%arg0: i32) -> (i32, i32) {
    %c0_i32 = arith.constant 0 : i32
    %c0_i32_0 = arith.constant 0 : i32
    return %arg0, %c0_i32 : i32, i32
  }
  func.func @transform_1(%arg0: i32) -> (i32, i32) {
    %c0_i32 = arith.constant 0 : i32
    %c0_i32_0 = arith.constant 0 : i32
    %c0_i32_1 = arith.constant 0 : i32
    return %c0_i32, %c0_i32_0 : i32, i32
  }
  func.func @transform_2(%arg0: i32) -> (i32, i32) {
    %c0_i32 = arith.constant 0 : i32
    %c0_i32_0 = arith.constant 0 : i32
    %c0_i32_1 = arith.constant 0 : i32
    return %c0_i32, %c0_i32_0 : i32, i32
  }
  func.func @transform_3(%arg0: i32) -> (i32, i32) {
    %c0_i32 = arith.constant 0 : i32
    %c0_i32_0 = arith.constant 0 : i32
    %c0_i32_1 = arith.constant 0 : i32
    return %c0_i32, %c0_i32_0 : i32, i32
  }
  func.func @transform_4(%arg0: i32) -> (i32, i32) {
    %c0_i32 = arith.constant 0 : i32
    %c0_i32_0 = arith.constant 0 : i32
    return %arg0, %c0_i32 : i32, i32
  }
}

</mosaic_0001>

<llo_original>
// kernel: tpu_custom_call.1
$region0: #{tpu_custom_call.1}
  #allocation0 [shape = 'u32[]', space=smem, size = 0x4, offset = 0x4, fixed_abs, tag = 'smem constant byte address 0x4 - core index']
  #allocation1 [shape = 'u32[144,128]{1,0:T(1,128)}', space=vmem, size = 0x12000, scoped, tag = 'internal scratch']
  %s0 = inlined_call_operand.hbm [shape: f32[2,8], index: 0, kind: input, shape index: {}]
  %s1 = inlined_call_operand.vmem [shape: f32[1,128], index: 1, kind: input, shape index: {}]
  %s2 = inlined_call_operand.vmem [shape: f32[1,128], index: 2, kind: input, shape index: {}]
  %s3 = inlined_call_operand.vmem [shape: f32[8,128], index: 3, kind: input, shape index: {}]
  %s4 = inlined_call_operand.hbm [shape: f32[2,128], index: 4, kind: output, shape index: {}]
  %s5 = sld [smem:[#allocation0]]
  $region30: #{tpu_custom_call.1} parent=0
    _
  %s7 = ssub.s32 1, %s5
  %s8 = scalar_select 0, %s7, %s5
  $region1: #{tpu_custom_call.1} parent=0
    #allocation2 [shape = 'u8[4096]{0}', space=vmem, size = 0x1000, scoped, tag = 'input window, operand 0, single buffered']
    #allocation3 [shape = 's32[1]{0}', space=sflag, size = 0x4, scoped, tag = 'scoped memory for tpu_custom_call.1']
    #allocation4 [shape = 's32[1]{0}', space=sflag, size = 0x4, scoped, tag = 'scoped memory for tpu_custom_call.1']
    #allocation5 [shape = 'u8[4096]{0}', space=vmem, size = 0x1000, scoped, tag = 'output window, operand 0, single buffered']
    %9 = vsyncpa [#allocation3], 0
    %10 = vsyncpa [#allocation4], 0
    // Predicated region
    $region2: #{tpu_custom_call.1} parent=1 // pred_check
      _
    $region3: #{tpu_custom_call.1} parent=1 // pred_check_branch
      %12 = sbr.rel (0) target = $region5
    $region4: #{tpu_custom_call.1} parent=1 // pred_region
      %s14 = ssub.s32 128, 32
      %15 = vsyncadd [#allocation3], %s14
      %s16 = sshll.u32 [#allocation2], 4
      %s17 = int_to_ptr.vmem [resolvable:$true] %s16
      %22 = dma.hbm_to_vmem [thread:$0]  %s0, 32, %s17, [#allocation3], 32, 32, 2
    $region5: #{tpu_custom_call.1} parent=1 // pred_fallthru
      _
    // Predicated region
    $region6: #{tpu_custom_call.1} parent=1 // pred_check
      _
    $region7: #{tpu_custom_call.1} parent=1 // pred_check_branch
      %24 = sbr.rel (0) target = $region9
    $region8: #{tpu_custom_call.1} parent=1 // pred_region
      _
    $region9: #{tpu_custom_call.1} parent=1 // pred_fallthru
      _
    // Predicated region
    $region10: #{tpu_custom_call.1} parent=1 // pred_check
      _
    $region11: #{tpu_custom_call.1} parent=1 // pred_check_branch
      %26 = sbr.rel (0) target = $region13
    $region12: #{tpu_custom_call.1} parent=1 // pred_region
      _
    $region13: #{tpu_custom_call.1} parent=1 // pred_fallthru
      _
    // Predicated region
    $region14: #{tpu_custom_call.1} parent=1 // pred_check
      _
    $region15: #{tpu_custom_call.1} parent=1 // pred_check_branch
      %28 = sbr.rel (0) target = $region17
    $region16: #{tpu_custom_call.1} parent=1 // pred_region
      _
    $region17: #{tpu_custom_call.1} parent=1 // pred_fallthru
      _
    // Predicated region
    $region18: #{tpu_custom_call.1} parent=1 // pred_check
      _
    $region19: #{tpu_custom_call.1} parent=1 // pred_check_branch
      %30 = sbr.rel (0) target = $region21
    $region20: #{tpu_custom_call.1} parent=1 // pred_region
      %31 = dma.done [#allocation3], 128
    $region21: #{tpu_custom_call.1} parent=1 // pred_fallthru
      _
    %v32 = vld [vmem:[#allocation2] sm:$0xff]
    %v33 = vld [vmem:[%s3] sm:$0xff]
    %vm34 = vcmask 64512
    %v36 = vsel %vm34, %v32, 0
    %38 = vmatprep.subr.mxu0 0.0
    %v39 = vand.u32 %v33, 4294901760
    %40 = vmatpush1.msra.mxu0 %v39
    %41 = vmatprep.subr.mxu0 0.0
    %42 = vmatpush1.msra.mxu0 0.0
    %43 = vmatprep.subr.mxu0 0.0
    %44 = vmatpush1.msra.mxu0 0.0
    %45 = vmatprep.subr.mxu0 0.0
    %46 = vmatpush1.msra.mxu0 0.0
    %47 = vmatprep.subr.mxu0 0.0
    %48 = vmatpush1.msra.mxu0 0.0
    %49 = vmatprep.subr.mxu0 0.0
    %50 = vmatpush1.msra.mxu0 0.0
    %51 = vmatprep.subr.mxu0 0.0
    %52 = vmatpush1.msra.mxu0 0.0
    %53 = vmatprep.subr.mxu0 0.0
    %54 = vmatpush1.msra.mxu0 0.0
    %55 = vmatprep.subr.mxu0 0.0
    %56 = vmatpush1.msra.mxu0 0.0
    %57 = vmatprep.subr.mxu0 0.0
    %58 = vmatpush1.msra.mxu0 0.0
    %59 = vmatprep.subr.mxu0 0.0
    %60 = vmatpush1.msra.mxu0 0.0
    %61 = vmatprep.subr.mxu0 0.0
    %62 = vmatpush1.msra.mxu0 0.0
    %63 = vmatprep.subr.mxu0 0.0
    %64 = vmatpush1.msra.mxu0 0.0
    %65 = vmatprep.subr.mxu0 0.0
    %66 = vmatpush1.msra.mxu0 0.0
    %67 = vmatprep.subr.mxu0 0.0
    %68 = vmatpush1.msra.mxu0 0.0
    %69 = vmatprep.subr.mxu0 0.0
    %70 = vmatpush1.msra.mxu0 0.0
    %71 = vmatprep.subr.mxu0 0.0
    %72 = vmatpush1.msra.mxu0 0.0
    %73 = vmatprep.subr.mxu0 0.0
    %74 = vmatpush1.msra.mxu0 0.0
    %75 = vmatprep.subr.mxu0 0.0
    %76 = vmatpush1.msra.mxu0 0.0
    %77 = vmatprep.subr.mxu0 0.0
    %78 = vmatpush1.msra.mxu0 0.0
    %79 = vmatprep.subr.mxu0 0.0
    %80 = vmatpush1.msra.mxu0 0.0
    %81 = vmatprep.subr.mxu0 0.0
    %82 = vmatpush1.msra.mxu0 0.0
    %83 = vmatprep.subr.mxu0 0.0
    %84 = vmatpush1.msra.mxu0 0.0
    %85 = vmatprep.subr.mxu0 0.0
    %86 = vmatpush1.msra.mxu0 0.0
    %87 = vmatprep.subr.mxu0 0.0
    %88 = vmatpush1.msra.mxu0 0.0
    %89 = vmatprep.subr.mxu0 0.0
    %90 = vmatpush1.msra.mxu0 0.0
    %91 = vmatprep.subr.mxu0 0.0
    %92 = vmatpush1.msra.mxu0 0.0
    %93 = vmatprep.subr.mxu0 0.0
    %94 = vmatpush1.msra.mxu0 0.0
    %95 = vmatprep.subr.mxu0 0.0
    %96 = vmatpush1.msra.mxu0 0.0
    %97 = vmatprep.subr.mxu0 0.0
    %98 = vmatpush1.msra.mxu0 0.0
    %99 = vmatprep.subr.mxu0 0.0
    %100 = vmatpush1.msra.mxu0 0.0
    %101 = vmatprep.subr.mxu0 0.0
    %102 = vmatpush1.msra.mxu0 0.0
    %103 = vmatprep.mubr.f32.mxu0 0.0
    %v104 = vand.u32 %v36, 4294901760
    %v105 = vsub.f32 %v36, %v104
    %v106 = vand.u32 %v105, 4294901760
    %v107 = vsub.f32 %v105, %v106
    %v108 = vand.u32 %v107, 4294901760
    %109 = vmatmul.mubr.f32.gmra.mrb[0].mxu0 %v108
    %v110 = vpop.f32.mrb[0].mxu0
    %v111 = vadd.f32 0.0, %v110
    %v112 = vpop.f32.mrb[0].mxu0
    %113 = vdwg.mxu0
    %114 = vmatprep.subr.mxu0 0.0
    %v115 = vand.u32 %v33, 4294901760
    %v116 = vsub.f32 %v33, %v115
    %v117 = vand.u32 %v116, 4294901760
    %v118 = vsub.f32 %v116, %v117
    %v119 = vand.u32 %v118, 4294901760
    %120 = vmatpush1.msra.mxu0 %v119
    %121 = vmatprep.subr.mxu0 0.0
    %122 = vmatpush1.msra.mxu0 0.0
    %123 = vmatprep.subr.mxu0 0.0
    %124 = vmatpush1.msra.mxu0 0.0
    %125 = vmatprep.subr.mxu0 0.0
    %126 = vmatpush1.msra.mxu0 0.0
    %127 = vmatprep.subr.mxu0 0.0
    %128 = vmatpush1.msra.mxu0 0.0
    %129 = vmatprep.subr.mxu0 0.0
    %130 = vmatpush1.msra.mxu0 0.0
    %131 = vmatprep.subr.mxu0 0.0
    %132 = vmatpush1.msra.mxu0 0.0
    %133 = vmatprep.subr.mxu0 0.0
    %134 = vmatpush1.msra.mxu0 0.0
    %135 = vmatprep.subr.mxu0 0.0
    %136 = vmatpush1.msra.mxu0 0.0
    %137 = vmatprep.subr.mxu0 0.0
    %138 = vmatpush1.msra.mxu0 0.0
    %139 = vmatprep.subr.mxu0 0.0
    %140 = vmatpush1.msra.mxu0 0.0
    %141 = vmatprep.subr.mxu0 0.0
    %142 = vmatpush1.msra.mxu0 0.0
    %143 = vmatprep.subr.mxu0 0.0
    %144 = vmatpush1.msra.mxu0 0.0
    %145 = vmatprep.subr.mxu0 0.0
    %146 = vmatpush1.msra.mxu0 0.0
    %147 = vmatprep.subr.mxu0 0.0
    %148 = vmatpush1.msra.mxu0 0.0
    %149 = vmatprep.subr.mxu0 0.0
    %150 = vmatpush1.msra.mxu0 0.0
    %151 = vmatprep.subr.mxu0 0.0
    %152 = vmatpush1.msra.mxu0 0.0
    %153 = vmatprep.subr.mxu0 0.0
    %154 = vmatpush1.msra.mxu0 0.0
    %155 = vmatprep.subr.mxu0 0.0
    %156 = vmatpush1.msra.mxu0 0.0
    %157 = vmatprep.subr.mxu0 0.0
    %158 = vmatpush1.msra.mxu0 0.0
    %159 = vmatprep.subr.mxu0 0.0
    %160 = vmatpush1.msra.mxu0 0.0
    %161 = vmatprep.subr.mxu0 0.0
    %162 = vmatpush1.msra.mxu0 0.0
    %163 = vmatprep.subr.mxu0 0.0
    %164 = vmatpush1.msra.mxu0 0.0
    %165 = vmatprep.subr.mxu0 0.0
    %166 = vmatpush1.msra.mxu0 0.0
    %167 = vmatprep.subr.mxu0 0.0
    %168 = vmatpush1.msra.mxu0 0.0
    %169 = vmatprep.subr.mxu0 0.0
    %170 = vmatpush1.msra.mxu0 0.0
    %171 = vmatprep.subr.mxu0 0.0
    %172 = vmatpush1.msra.mxu0 0.0
    %173 = vmatprep.subr.mxu0 0.0
    %174 = vmatpush1.msra.mxu0 0.0
    %175 = vmatprep.subr.mxu0 0.0
    %176 = vmatpush1.msra.mxu0 0.0
    %177 = vmatprep.subr.mxu0 0.0
    %178 = vmatpush1.msra.mxu0 0.0
    %179 = vmatprep.subr.mxu0 0.0
    %180 = vmatpush1.msra.mxu0 0.0
    %181 = vmatprep.subr.mxu0 0.0
    %182 = vmatpush1.msra.mxu0 0.0
    %183 = vmatprep.mubr.f32.mxu0 0.0
    %v184 = vand.u32 %v36, 4294901760
    %185 = vmatmul.mubr.f32.gmra.mrb[0].mxu0 %v184
    %v186 = vpop.f32.mrb[0].mxu0
    %v187 = vadd.f32 %v111, %v186
    %v188 = vpop.f32.mrb[0].mxu0
    %189 = vdwg.mxu0
    %190 = vmatprep.subr.mxu0 0.0
    %v191 = vand.u32 %v33, 4294901760
    %v192 = vsub.f32 %v33, %v191
    %193 = vmatpush1.msra.mxu0 %v192
    %194 = vmatprep.subr.mxu0 0.0
    %195 = vmatpush1.msra.mxu0 0.0
    %196 = vmatprep.subr.mxu0 0.0
    %197 = vmatpush1.msra.mxu0 0.0
    %198 = vmatprep.subr.mxu0 0.0
    %199 = vmatpush1.msra.mxu0 0.0
    %200 = vmatprep.subr.mxu0 0.0
    %201 = vmatpush1.msra.mxu0 0.0
    %202 = vmatprep.subr.mxu0 0.0
    %203 = vmatpush1.msra.mxu0 0.0
    %204 = vmatprep.subr.mxu0 0.0
    %205 = vmatpush1.msra.mxu0 0.0
    %206 = vmatprep.subr.mxu0 0.0
    %207 = vmatpush1.msra.mxu0 0.0
    %208 = vmatprep.subr.mxu0 0.0
    %209 = vmatpush1.msra.mxu0 0.0
    %210 = vmatprep.subr.mxu0 0.0
    %211 = vmatpush1.msra.mxu0 0.0
    %212 = vmatprep.subr.mxu0 0.0
    %213 = vmatpush1.msra.mxu0 0.0
    %214 = vmatprep.subr.mxu0 0.0
    %215 = vmatpush1.msra.mxu0 0.0
    %216 = vmatprep.subr.mxu0 0.0
    %217 = vmatpush1.msra.mxu0 0.0
    %218 = vmatprep.subr.mxu0 0.0
    %219 = vmatpush1.msra.mxu0 0.0
    %220 = vmatprep.subr.mxu0 0.0
    %221 = vmatpush1.msra.mxu0 0.0
    %222 = vmatprep.subr.mxu0 0.0
    %223 = vmatpush1.msra.mxu0 0.0
    %224 = vmatprep.subr.mxu0 0.0
    %225 = vmatpush1.msra.mxu0 0.0
    %226 = vmatprep.subr.mxu0 0.0
    %227 = vmatpush1.msra.mxu0 0.0
    %228 = vmatprep.subr.mxu0 0.0
    %229 = vmatpush1.msra.mxu0 0.0
    %230 = vmatprep.subr.mxu0 0.0
    %231 = vmatpush1.msra.mxu0 0.0
    %232 = vmatprep.subr.mxu0 0.0
    %233 = vmatpush1.msra.mxu0 0.0
    %234 = vmatprep.subr.mxu0 0.0
    %235 = vmatpush1.msra.mxu0 0.0
    %236 = vmatprep.subr.mxu0 0.0
    %237 = vmatpush1.msra.mxu0 0.0
    %238 = vmatprep.subr.mxu0 0.0
    %239 = vmatpush1.msra.mxu0 0.0
    %240 = vmatprep.subr.mxu0 0.0
    %241 = vmatpush1.msra.mxu0 0.0
    %242 = vmatprep.subr.mxu0 0.0
    %243 = vmatpush1.msra.mxu0 0.0
    %244 = vmatprep.subr.mxu0 0.0
    %245 = vmatpush1.msra.mxu0 0.0
    %246 = vmatprep.subr.mxu0 0.0
    %247 = vmatpush1.msra.mxu0 0.0
    %248 = vmatprep.subr.mxu0 0.0
    %249 = vmatpush1.msra.mxu0 0.0
    %250 = vmatprep.subr.mxu0 0.0
    %251 = vmatpush1.msra.mxu0 0.0
    %252 = vmatprep.subr.mxu0 0.0
    %253 = vmatpush1.msra.mxu0 0.0
    %254 = vmatprep.subr.mxu0 0.0
    %255 = vmatpush1.msra.mxu0 0.0
    %256 = vmatprep.mubr.f32.mxu0 0.0
    %v257 = vand.u32 %v36, 4294901760
    %v258 = vsub.f32 %v36, %v257
    %259 = vmatmul.mubr.f32.gmra.mrb[0].mxu0 %v258
    %v260 = vpop.f32.mrb[0].mxu0
    %v261 = vadd.f32 %v187, %v260
    %v262 = vpop.f32.mrb[0].mxu0
    %263 = vdwg.mxu0
    %264 = vmatprep.subr.mxu0 0.0
    %v265 = vand.u32 %v33, 4294901760
    %266 = vmatpush1.msra.mxu0 %v265
    %267 = vmatprep.subr.mxu0 0.0
    %268 = vmatpush1.msra.mxu0 0.0
    %269 = vmatprep.subr.mxu0 0.0
    %270 = vmatpush1.msra.mxu0 0.0
    %271 = vmatprep.subr.mxu0 0.0
    %272 = vmatpush1.msra.mxu0 0.0
    %273 = vmatprep.subr.mxu0 0.0
    %274 = vmatpush1.msra.mxu0 0.0
    %275 = vmatprep.subr.mxu0 0.0
    %276 = vmatpush1.msra.mxu0 0.0
    %277 = vmatprep.subr.mxu0 0.0
    %278 = vmatpush1.msra.mxu0 0.0
    %279 = vmatprep.subr.mxu0 0.0
    %280 = vmatpush1.msra.mxu0 0.0
    %281 = vmatprep.subr.mxu0 0.0
    %282 = vmatpush1.msra.mxu0 0.0
    %283 = vmatprep.subr.mxu0 0.0
    %284 = vmatpush1.msra.mxu0 0.0
    %285 = vmatprep.subr.mxu0 0.0
    %286 = vmatpush1.msra.mxu0 0.0
    %287 = vmatprep.subr.mxu0 0.0
    %288 = vmatpush1.msra.mxu0 0.0
    %289 = vmatprep.subr.mxu0 0.0
    %290 = vmatpush1.msra.mxu0 0.0
    %291 = vmatprep.subr.mxu0 0.0
    %292 = vmatpush1.msra.mxu0 0.0
    %293 = vmatprep.subr.mxu0 0.0
    %294 = vmatpush1.msra.mxu0 0.0
    %295 = vmatprep.subr.mxu0 0.0
    %296 = vmatpush1.msra.mxu0 0.0
    %297 = vmatprep.subr.mxu0 0.0
    %298 = vmatpush1.msra.mxu0 0.0
    %299 = vmatprep.subr.mxu0 0.0
    %300 = vmatpush1.msra.mxu0 0.0
    %301 = vmatprep.subr.mxu0 0.0
    %302 = vmatpush1.msra.mxu0 0.0
    %303 = vmatprep.subr.mxu0 0.0
    %304 = vmatpush1.msra.mxu0 0.0
    %305 = vmatprep.subr.mxu0 0.0
    %306 = vmatpush1.msra.mxu0 0.0
    %307 = vmatprep.subr.mxu0 0.0
    %308 = vmatpush1.msra.mxu0 0.0
    %309 = vmatprep.subr.mxu0 0.0
    %310 = vmatpush1.msra.mxu0 0.0
    %311 = vmatprep.subr.mxu0 0.0
    %312 = vmatpush1.msra.mxu0 0.0
    %313 = vmatprep.subr.mxu0 0.0
    %314 = vmatpush1.msra.mxu0 0.0
    %315 = vmatprep.subr.mxu0 0.0
    %316 = vmatpush1.msra.mxu0 0.0
    %317 = vmatprep.subr.mxu0 0.0
    %318 = vmatpush1.msra.mxu0 0.0
    %319 = vmatprep.subr.mxu0 0.0
    %320 = vmatpush1.msra.mxu0 0.0
    %321 = vmatprep.subr.mxu0 0.0
    %322 = vmatpush1.msra.mxu0 0.0
    %323 = vmatprep.subr.mxu0 0.0
    %324 = vmatpush1.msra.mxu0 0.0
    %325 = vmatprep.subr.mxu0 0.0
    %326 = vmatpush1.msra.mxu0 0.0
    %327 = vmatprep.subr.mxu0 0.0
    %328 = vmatpush1.msra.mxu0 0.0
    %329 = vmatprep.mubr.f32.mxu0 0.0
    %v330 = vand.u32 %v36, 4294901760
    %v331 = vsub.f32 %v36, %v330
    %v332 = vand.u32 %v331, 4294901760
    %333 = vmatmul.mubr.f32.gmra.mrb[0].mxu0 %v332
    %v334 = vpop.f32.mrb[0].mxu0
    %v335 = vadd.f32 %v261, %v334
    %v336 = vpop.f32.mrb[0].mxu0
    %337 = vdwg.mxu0
    %338 = vmatprep.subr.mxu0 0.0
    %v339 = vand.u32 %v33, 4294901760
    %v340 = vsub.f32 %v33, %v339
    %v341 = vand.u32 %v340, 4294901760
    %342 = vmatpush1.msra.mxu0 %v341
    %343 = vmatprep.subr.mxu0 0.0
    %344 = vmatpush1.msra.mxu0 0.0
    %345 = vmatprep.subr.mxu0 0.0
    %346 = vmatpush1.msra.mxu0 0.0
    %347 = vmatprep.subr.mxu0 0.0
    %348 = vmatpush1.msra.mxu0 0.0
    %349 = vmatprep.subr.mxu0 0.0
    %350 = vmatpush1.msra.mxu0 0.0
    %351 = vmatprep.subr.mxu0 0.0
    %352 = vmatpush1.msra.mxu0 0.0
    %353 = vmatprep.subr.mxu0 0.0
    %354 = vmatpush1.msra.mxu0 0.0
    %355 = vmatprep.subr.mxu0 0.0
    %356 = vmatpush1.msra.mxu0 0.0
    %357 = vmatprep.subr.mxu0 0.0
    %358 = vmatpush1.msra.mxu0 0.0
    %359 = vmatprep.subr.mxu0 0.0
    %360 = vmatpush1.msra.mxu0 0.0
    %361 = vmatprep.subr.mxu0 0.0
    %362 = vmatpush1.msra.mxu0 0.0
    %363 = vmatprep.subr.mxu0 0.0
    %364 = vmatpush1.msra.mxu0 0.0
    %365 = vmatprep.subr.mxu0 0.0
    %366 = vmatpush1.msra.mxu0 0.0
    %367 = vmatprep.subr.mxu0 0.0
    %368 = vmatpush1.msra.mxu0 0.0
    %369 = vmatprep.subr.mxu0 0.0
    %370 = vmatpush1.msra.mxu0 0.0
    %371 = vmatprep.subr.mxu0 0.0
    %372 = vmatpush1.msra.mxu0 0.0
    %373 = vmatprep.subr.mxu0 0.0
    %374 = vmatpush1.msra.mxu0 0.0
    %375 = vmatprep.subr.mxu0 0.0
    %376 = vmatpush1.msra.mxu0 0.0
    %377 = vmatprep.subr.mxu0 0.0
    %378 = vmatpush1.msra.mxu0 0.0
    %379 = vmatprep.subr.mxu0 0.0
    %380 = vmatpush1.msra.mxu0 0.0
    %381 = vmatprep.subr.mxu0 0.0
    %382 = vmatpush1.msra.mxu0 0.0
    %383 = vmatprep.subr.mxu0 0.0
    %384 = vmatpush1.msra.mxu0 0.0
    %385 = vmatprep.subr.mxu0 0.0
    %386 = vmatpush1.msra.mxu0 0.0
    %387 = vmatprep.subr.mxu0 0.0
    %388 = vmatpush1.msra.mxu0 0.0
    %389 = vmatprep.subr.mxu0 0.0
    %390 = vmatpush1.msra.mxu0 0.0
    %391 = vmatprep.subr.mxu0 0.0
    %392 = vmatpush1.msra.mxu0 0.0
    %393 = vmatprep.subr.mxu0 0.0
    %394 = vmatpush1.msra.mxu0 0.0
    %395 = vmatprep.subr.mxu0 0.0
    %396 = vmatpush1.msra.mxu0 0.0
    %397 = vmatprep.subr.mxu0 0.0
    %398 = vmatpush1.msra.mxu0 0.0
    %399 = vmatprep.subr.mxu0 0.0
    %400 = vmatpush1.msra.mxu0 0.0
    %401 = vmatprep.subr.mxu0 0.0
    %402 = vmatpush1.msra.mxu0 0.0
    %403 = vmatprep.subr.mxu0 0.0
    %404 = vmatpush1.msra.mxu0 0.0
    %405 = vmatprep.mubr.f32.mxu0 0.0
    %v406 = vand.u32 %v36, 4294901760
    %407 = vmatmul.mubr.f32.gmra.mrb[0].mxu0 %v406
    %v408 = vpop.f32.mrb[0].mxu0
    %v409 = vadd.f32 %v335, %v408
    %v410 = vpop.f32.mrb[0].mxu0
    %411 = vdwg.mxu0
    %412 = vmatprep.subr.mxu0 0.0
    %v413 = vand.u32 %v33, 4294901760
    %414 = vmatpush1.msra.mxu0 %v413
    %415 = vmatprep.subr.mxu0 0.0
    %416 = vmatpush1.msra.mxu0 0.0
    %417 = vmatprep.subr.mxu0 0.0
    %418 = vmatpush1.msra.mxu0 0.0
    %419 = vmatprep.subr.mxu0 0.0
    %420 = vmatpush1.msra.mxu0 0.0
    %421 = vmatprep.subr.mxu0 0.0
    %422 = vmatpush1.msra.mxu0 0.0
    %423 = vmatprep.subr.mxu0 0.0
    %424 = vmatpush1.msra.mxu0 0.0
    %425 = vmatprep.subr.mxu0 0.0
    %426 = vmatpush1.msra.mxu0 0.0
    %427 = vmatprep.subr.mxu0 0.0
    %428 = vmatpush1.msra.mxu0 0.0
    %429 = vmatprep.subr.mxu0 0.0
    %430 = vmatpush1.msra.mxu0 0.0
    %431 = vmatprep.subr.mxu0 0.0
    %432 = vmatpush1.msra.mxu0 0.0
    %433 = vmatprep.subr.mxu0 0.0
    %434 = vmatpush1.msra.mxu0 0.0
    %435 = vmatprep.subr.mxu0 0.0
    %436 = vmatpush1.msra.mxu0 0.0
    %437 = vmatprep.subr.mxu0 0.0
    %438 = vmatpush1.msra.mxu0 0.0
    %439 = vmatprep.subr.mxu0 0.0
    %440 = vmatpush1.msra.mxu0 0.0
    %441 = vmatprep.subr.mxu0 0.0
    %442 = vmatpush1.msra.mxu0 0.0
    %443 = vmatprep.subr.mxu0 0.0
    %444 = vmatpush1.msra.mxu0 0.0
    %445 = vmatprep.subr.mxu0 0.0
    %446 = vmatpush1.msra.mxu0 0.0
    %447 = vmatprep.subr.mxu0 0.0
    %448 = vmatpush1.msra.mxu0 0.0
    %449 = vmatprep.subr.mxu0 0.0
    %450 = vmatpush1.msra.mxu0 0.0
    %451 = vmatprep.subr.mxu0 0.0
    %452 = vmatpush1.msra.mxu0 0.0
    %453 = vmatprep.subr.mxu0 0.0
    %454 = vmatpush1.msra.mxu0 0.0
    %455 = vmatprep.subr.mxu0 0.0
    %456 = vmatpush1.msra.mxu0 0.0
    %457 = vmatprep.subr.mxu0 0.0
    %458 = vmatpush1.msra.mxu0 0.0
    %459 = vmatprep.subr.mxu0 0.0
    %460 = vmatpush1.msra.mxu0 0.0
    %461 = vmatprep.subr.mxu0 0.0
    %462 = vmatpush1.msra.mxu0 0.0
    %463 = vmatprep.subr.mxu0 0.0
    %464 = vmatpush1.msra.mxu0 0.0
    %465 = vmatprep.subr.mxu0 0.0
    %466 = vmatpush1.msra.mxu0 0.0
    %467 = vmatprep.subr.mxu0 0.0
    %468 = vmatpush1.msra.mxu0 0.0
    %469 = vmatprep.subr.mxu0 0.0
    %470 = vmatpush1.msra.mxu0 0.0
    %471 = vmatprep.subr.mxu0 0.0
    %472 = vmatpush1.msra.mxu0 0.0
    %473 = vmatprep.subr.mxu0 0.0
    %474 = vmatpush1.msra.mxu0 0.0
    %475 = vmatprep.subr.mxu0 0.0
    %476 = vmatpush1.msra.mxu0 0.0
    %477 = vmatprep.mubr.f32.mxu0 0.0
    %v478 = vand.u32 %v36, 4294901760
    %479 = vmatmul.mubr.f32.gmra.mrb[0].mxu0 %v478
    %v480 = vpop.f32.mrb[0].mxu0
    %v481 = vadd.f32 %v409, %v480
    %v482 = vpop.f32.mrb[0].mxu0
    %483 = vdwg.mxu0
    %v484 = vld [vmem:[%s1] sm:$0x1]
    %v486 = vlaneseq
    %v487 = vshrl.u32 %v486, 7
    %v488 = vsub.s32 0, %v487
    %v489 = vrot.slane %v484, %v488
    %v491 = vmul.f32 %v481, %v489
    %v492 = vmul.f32 %v491, 1.442695
    %v493 = vpow.pop %v492
    %v494 = vmul.f32 %v481, %v493
    %v495 = vld [vmem:[%s2] sm:$0x1]
    %v497 = vlaneseq
    %v498 = vshrl.u32 %v497, 7
    %v499 = vsub.s32 0, %v498
    %v500 = vrot.slane %v495, %v499
    %v502 = vsub.f32 %v494, %v500
    %v503 = vand.u32 2147483647, %v502
    %vm504 = vcmp.le.f32.partialorder %v503, 0.7853982
    %vm505 = vcmp.lt.s32.totalorder %v502, 0
    %v506 = vand.u32 %v502, 2139095040
    %v507 = vshrl.u32 %v506, 23
    %v508 = vsub.s32 %v507, 127
    %v509 = vand.u32 2147483647, %v502
    %v510 = vand.u32 %v509, 8388607
    %v511 = vor.u32 %v510, 8388608
    %v512 = vsub.s32 0, %v511
    %v513 = vadd.s32 %v508, 1
    %vm514 = vcmp.gt.s32.totalorder %v513, 0
    %v515 = vsel %vm514, %v513, 0
    %v516 = vshrl.u32 %v515, 5
    %v517 = vand.u32 %v515, 31
    %v518 = vsub.s32 32, %v517
    %v519 = vshrl.u32 683565275, %v518
    %v520 = vshll.u32 683565275, %v517
    %v521 = vshrl.u32 2475754826, %v518
    %v522 = vor.u32 %v520, %v521
    %v523 = vshll.u32 2475754826, %v517
    %v524 = vshrl.u32 2131351028, %v518
    %v525 = vor.u32 %v523, %v524
    %v526 = vshll.u32 2131351028, %v517
    %v527 = vshrl.u32 2102212464, %v518
    %v528 = vor.u32 %v526, %v527
    %v529 = vshll.u32 2102212464, %v517
    %v530 = vshrl.u32 920167782, %v518
    %v531 = vor.u32 %v529, %v530
    %v532 = vshll.u32 920167782, %v517
    %v533 = vshrl.u32 1326507024, %v518
    %v534 = vor.u32 %v532, %v533
    %vm535 = vcmp.lt.s32.totalorder %v516, 1
    %vm536 = vcmp.lt.s32.totalorder %v516, 2
    %vm537 = vcmp.lt.s32.totalorder %v516, 3
    %vm538 = vcmp.lt.s32.totalorder %v516, 4
    %v539 = vsel %vm535, %v519, %v522
    %v540 = vsel %vm538, %v528, 2102212464
    %v541 = vsel %vm537, %v525, %v540
    %v542 = vsel %vm536, %v539, %v541
    %v543 = vsel %vm535, %v522, %v525
    %v544 = vsel %vm538, %v531, 920167782
    %v545 = vsel %vm537, %v528, %v544
    %v546 = vsel %vm536, %v543, %v545
    %v547 = vsel %vm535, %v525, %v528
    %v548 = vsel %vm538, %v534, 1326507024
    %v549 = vsel %vm537, %v531, %v548
    %v550 = vsel %vm536, %v547, %v549
    %v551 = vshll.u32 %v511, 8
    %v552 = vmul.u32.u64.compose %v551, %v550
    %v553 = vextract.low.u32 %v552
    %v554 = vextract.high.u32 %v552
    %v555 = vmul.u32.u64.compose %v551, %v546
    %v556 = vextract.low.u32 %v555
    %v557 = vextract.high.u32 %v555
    %v558 = vmul.u32 %v551, %v542
    %v559 = vadd.s32 %v554, %v556
    %vm560 = vc.u32 %v554, %v556
    %v561 = vadd.s32 %v557, 1
    %v562 = vsel %vm560, %v561, %v557
    %v563 = vadd.s32 %v558, %v562
    %v564 = vadd.s32 %v563, 536870912
    %v565 = vshrl.u32 %v564, 30
    %v566 = vshll.u32 %v565, 30
    %v567 = vsub.s32 %v563, %v566
    %vm568 = vcmp.lt.s32.totalorder %v567, 0
    %v569 = vsub.s32 0, %v567
    %v570 = vsel %vm568, %v569, %v567
    %v571 = vclz %v570
    %v572 = vsub.s32 %v571, 2
    %vm573 = vcmp.gt.s32.totalorder 0, %v572
    %v574 = vsel %vm573, 0, %v572
    %v575 = vsub.s32 32, %v574
    %v576 = vshll.u32 %v567, %v574
    %v577 = vshrl.u32 %v559, %v575
    %v578 = vor.u32 %v576, %v577
    %v579 = vsub.s32 4294967266, %v574
    %v580 = vadd.s32 %v579, 127
    %v581 = vshll.u32 %v580, 23
    %v582 = vor.u32 4788187, %v581
    %v583 = vand.u32 2147483647, %v582
    %v585 = vcvt.s32.f32 %v578
    %v586 = vmul.f32 %v585, %v583
    %v587 = vxor.u32 %v586, 2147483648
    %v588 = vsel %vm505, %v587, %v586
    %v589 = vsub.s32 4, %v565
    %v590 = vsel %vm505, %v589, %v565
    %v591 = vsel %vm504, %v502, %v588
    %v592 = vsel %vm504, 0, %v590
    %v593 = vcosq.f32.pop %v591
    %v594 = vsinq.f32.pop %v591
    %vm595 = vweird.f32 %v502
    %v596 = vand.u32 %v592, 3
    %vm597 = vcmp.lt.s32.totalorder %v596, 2
    %vm598 = vcmp.eq.s32.totalorder %v596, 0
    %v599 = vxor.u32 %v594, 2147483648
    %v600 = vsel %vm598, %v593, %v599
    %vm601 = vcmp.eq.s32.totalorder %v596, 2
    %v602 = vxor.u32 %v593, 2147483648
    %v603 = vsel %vm601, %v602, %v594
    %v604 = vsel %vm597, %v600, %v603
    %v605 = vsel %vm595, nan, %v604
    %606 = vst [vmem:[#allocation5] sm:$0xff] %v605
    // Predicated region
    $region22: #{tpu_custom_call.1} parent=1 // pred_check
      _
    $region23: #{tpu_custom_call.1} parent=1 // pred_check_branch
      %608 = sbr.rel (0) target = $region25
    $region24: #{tpu_custom_call.1} parent=1 // pred_region
      %s610 = ssub.s32 128, 32
      %611 = vsyncadd [#allocation4], %s610
      %s612 = sshll.u32 [#allocation5], 4
      %s613 = int_to_ptr.vmem [resolvable:$true] %s612
      %618 = dma.vmem_to_hbm [thread:$0]  %s613, 32, %s4, [#allocation4], 32, 32, 2
    $region25: #{tpu_custom_call.1} parent=1 // pred_fallthru
      _
    // Predicated region
    $region26: #{tpu_custom_call.1} parent=1 // pred_check
      _
    $region27: #{tpu_custom_call.1} parent=1 // pred_check_branch
      %620 = sbr.rel (0) target = $region29
    $region28: #{tpu_custom_call.1} parent=1 // pred_region
      %621 = dma.done [#allocation4], 128
    $region29: #{tpu_custom_call.1} parent=1 // pred_fallthru
      _
    %622 = vsyncpa [#allocation3], 1
    %623 = vsyncpa [#allocation4], 1

</llo_original>
